<compile_context>
chip_gen: v7x
topology: tpu7x:2x2x1
jax: 0.10.0
libtpu: 0.0.40
codegen_flags: <defaults>
</compile_context>

<pallas_src>
import jax
import jax.numpy as jnp
from jax.experimental import pallas as pl
from jax.experimental.pallas import tpu as pltpu

CONTEXT_SIZE = 2
EMBEDDING_DIM = 10
HIDDEN = 128
BLOCK_B = 512          # contexts per grid step (auto-shrunk for small batches)
LANE = 128             # TPU lane width; pad vocab dim to a multiple of this
NEG_INF = -1e30        # effectively -inf for float32 exp()

test_sentence = (
    "When forty winters shall besiege thy brow,\nAnd dig deep trenches in thy "
    "beauty's field,\nThy youth's proud livery so gazed on now,\nWill be a "
    "totter'd weed of small worth held:\nThen being asked, where all thy beauty "
    "lies,\nWhere all the treasure of thy lusty days;\nTo say, within thine own "
    "deep sunken eyes,\nWere an all-eating shame, and thriftless praise.\nHow "
    "much more praise deserv'd thy beauty's use,\nIf thou couldst answer 'This "
    "fair child of mine\nShall sum my count, and make my old excuse,'\nProving "
    "his beauty by succession thine!\nThis were to be new made when thou art "
    "old,\nAnd see thy blood warm when thou feel'st it cold."
).split()


def _round_up(x, m):
    return ((x + m - 1) // m) * m


def ngram_kernel(idx_ref, t_ref, b1_ref, w2t_ref, b2_ref, out_ref):
    """One batch tile: (TB, C) pre-offset int32 indices -> (TB, Vpad) log-probs."""
    tb, c_size = idx_ref.shape
    cvpad = t_ref.shape[0]

    idx = idx_ref[...]                                            # (TB, C) int32, pre-offset
    lane = jax.lax.broadcasted_iota(jnp.int32, (tb, cvpad), 1)    # (TB, C*Vpad)

    # Combined one-hot over all context slots (indices already carry c*Vpad).
    sel = lane == idx[:, 0:1]
    for c in range(1, c_size):
        sel = jnp.logical_or(sel, lane == idx[:, c:c + 1])
    onehot = sel.astype(jnp.float32)                              # (TB, C*Vpad)

    # Fused embedding gather + linear1: T = blockdiag(emb) @ W1^T was folded on
    # the host, so one K = C*Vpad MXU pass produces the hidden layer directly.
    h = jnp.dot(onehot, t_ref[...],
                preferred_element_type=jnp.float32) + b1_ref[...]  # (TB, H)
    h = jnp.maximum(h, 0.0)

    # linear2; padded vocab columns have zero weights and a -1e30 bias so they
    # vanish in the softmax normaliser.
    logits = (jnp.dot(h, w2t_ref[...], preferred_element_type=jnp.float32)
              + b2_ref[...])                                      # (TB, Vpad)

    # Numerically stable log-softmax along the lane axis.
    m = jnp.max(logits, axis=-1, keepdims=True)
    lse = jnp.log(jnp.sum(jnp.exp(logits - m), axis=-1, keepdims=True)) + m
    out_ref[...] = logits - lse


def ngram_forward_batched(indices, emb, w1, b1, w2, b2, *, block_b=BLOCK_B):
    """Apply the module forward to a batch of contexts.

    indices: (B, C) int | emb: (V, D) | w1: (H, C*D) | b1: (H,) | w2: (V, H) | b2: (V,)
    Returns (B, V) float32 log-probabilities; row i == module.forward(context i).
    """
    indices = jnp.asarray(indices, jnp.int32)
    bsz, c_size = indices.shape
    vocab, dim = emb.shape
    hidden = w1.shape[0]

    vpad = _round_up(vocab, LANE)

    # Batch tiling: lane-width granularity, large tiles to amortise per-step
    # overhead, and >= 2 grid steps when the batch allows so v7x's two
    # TensorCores both get work on the "parallel" axis.
    bpad = _round_up(bsz, LANE)
    block_b = min(block_b, bpad)
    if bpad // block_b < 2 and bpad >= 2 * LANE:
        block_b = bpad // 2                      # multiple of 64 -> sublane-aligned
    bpad = _round_up(bpad, block_b)

    # Host-side fold: T[c*Vpad + v, :] = emb[v, :] @ W1^T[c*D:(c+1)*D, :].
    # Exact transformation (both ops linear); done in f32 at HIGHEST precision.
    emb_f = emb.astype(jnp.float32)
    w1t = w1.T.astype(jnp.float32)                                 # (C*D, H)
    t_tab = jnp.zeros((c_size * vpad, hidden), jnp.float32)
    for c in range(c_size):
        t_c = jnp.dot(emb_f, w1t[c * dim:(c + 1) * dim, :],
                      precision=jax.lax.Precision.HIGHEST)         # (V, H)
        t_tab = t_tab.at[c * vpad:c * vpad + vocab, :].set(t_c)

    b1r = b1.reshape(1, hidden).astype(jnp.float32)                # (1, H)
    w2t = jnp.zeros((hidden, vpad), jnp.float32).at[:, :vocab].set(
        w2.T.astype(jnp.float32))                                  # (H, Vpad)
    b2r = jnp.full((1, vpad), NEG_INF, jnp.float32).at[:, :vocab].set(
        b2.astype(jnp.float32))                                    # (1, Vpad)

    # Pre-offset indices: slot c of row b must light lane c*Vpad + idx[b, c].
    offs = (jnp.arange(c_size, dtype=jnp.int32) * vpad)[None, :]
    idx_p = jnp.zeros((bpad, c_size), jnp.int32).at[:bsz].set(indices + offs)

    out = pl.pallas_call(
        ngram_kernel,
        out_shape=jax.ShapeDtypeStruct((bpad, vpad), jnp.float32),
        grid=(bpad // block_b,),
        in_specs=[
            pl.BlockSpec((block_b, c_size), lambda i: (i, 0)),             # per-tile indices
            pl.BlockSpec((c_size * vpad, hidden), lambda i: (0, 0)),       # resident folded T
            pl.BlockSpec((1, hidden), lambda i: (0, 0)),                   # resident b1
            pl.BlockSpec((hidden, vpad), lambda i: (0, 0)),                # resident W2^T
            pl.BlockSpec((1, vpad), lambda i: (0, 0)),                     # resident b2
        ],
        out_specs=pl.BlockSpec((block_b, vpad), lambda i: (i, 0)),
        compiler_params=pltpu.CompilerParams(
            dimension_semantics=("parallel",)),
    )(idx_p, t_tab, b1r, w2t, b2r)

    return out[:bsz, :vocab]


def ngram_forward(context_indices, emb, w1, b1, w2, b2):
    """Original single-context module interface: (C,) -> (1, V)."""
    return ngram_forward_batched(context_indices[None, :], emb, w1, b1, w2, b2)


def ngram_reference(indices, emb, w1, b1, w2, b2):
    x = emb[indices].reshape(indices.shape[0], -1)
    h = jax.nn.relu(x @ w1.T + b1)
    logits = h @ w2.T + b2
    return jax.nn.log_softmax(logits, axis=-1)


if __name__ == "__main__":
    vocab_words = sorted(set(test_sentence))
    word_to_idx = {w: i for i, w in enumerate(vocab_words)}
    V = len(vocab_words)

    key = jax.random.PRNGKey(0)
    k_emb, k_w1, k_b1, k_w2, k_b2 = jax.random.split(key, 5)

    # Deterministic parameter init (shapes match nn.Embedding / nn.Linear).
    emb = jax.random.normal(k_emb, (V, EMBEDDING_DIM), jnp.float32)
    lim1 = 1.0 / (CONTEXT_SIZE * EMBEDDING_DIM) ** 0.5
    w1 = jax.random.uniform(k_w1, (HIDDEN, CONTEXT_SIZE * EMBEDDING_DIM),
                            jnp.float32, -lim1, lim1)
    b1 = jax.random.uniform(k_b1, (HIDDEN,), jnp.float32, -lim1, lim1)
    lim2 = 1.0 / HIDDEN ** 0.5
    w2 = jax.random.uniform(k_w2, (V, HIDDEN), jnp.float32, -lim2, lim2)
    b2 = jax.random.uniform(k_b2, (V,), jnp.float32, -lim2, lim2)

    # All trigram contexts of the sonnet, scored in one batched kernel call.
    contexts = jnp.array(
        [[word_to_idx[test_sentence[i]], word_to_idx[test_sentence[i + 1]]]
         for i in range(len(test_sentence) - CONTEXT_SIZE)],
        dtype=jnp.int32)                                   # (113, 2)

    log_probs = ngram_forward_batched(contexts, emb, w1, b1, w2, b2)
    jax.block_until_ready(log_probs)

    ref = ngram_reference(contexts, emb, w1, b1, w2, b2)
    assert log_probs.shape == (contexts.shape[0], V)
    assert jnp.allclose(log_probs, ref, atol=1e-5, rtol=1e-5)

    # Larger batch exercises the multi-step "parallel" grid (2 tiles of 256).
    big = jnp.tile(contexts, (4, 1))                        # (452, 2)
    big_out = ngram_forward_batched(big, emb, w1, b1, w2, b2)
    jax.block_until_ready(big_out)
    assert big_out.shape == (big.shape[0], V)
    assert jnp.allclose(big_out, jnp.tile(ref, (4, 1)), atol=1e-5, rtol=1e-5)

    # Original single-context interface still matches: (C,) -> (1, V).
    single = ngram_forward(contexts[0], emb, w1, b1, w2, b2)
    jax.block_until_ready(single)
    assert single.shape == (1, V)
    assert jnp.allclose(single, ref[0:1], atol=1e-5, rtol=1e-5)

    print("KERNEL_OK")
</pallas_src>

<mosaic_0001>
module attributes {stable_mosaic.version = 11 : i64} {
  func.func @ngram_kernel(%arg0: i32, %arg1: memref<128x2xi32, #tpu.memory_space<vmem>>, %arg2: memref<256x128xf32, #tpu.memory_space<vmem>>, %arg3: memref<1x128xf32, #tpu.memory_space<vmem>>, %arg4: memref<128x128xf32, #tpu.memory_space<vmem>>, %arg5: memref<1x128xf32, #tpu.memory_space<vmem>>, %arg6: memref<128x128xf32, #tpu.memory_space<vmem>>) attributes {dimension_semantics = [#tpu.dimension_semantics<parallel>], iteration_bounds = array<i64: 1>, scalar_prefetch = 0 : i64, scratch_operands = 0 : i64, tpu.core_type = #tpu.core_type<tc>, window_params = [{transform_indices = @transform_0, window_bounds = array<i64: 128, 2>}, {pipeline_mode = #tpu.pipeline_mode<synchronous>, transform_indices = @transform_1, window_bounds = array<i64: 256, 128>}, {pipeline_mode = #tpu.pipeline_mode<synchronous>, transform_indices = @transform_2, window_bounds = array<i64: 1, 128>}, {pipeline_mode = #tpu.pipeline_mode<synchronous>, transform_indices = @transform_3, window_bounds = array<i64: 128, 128>}, {pipeline_mode = #tpu.pipeline_mode<synchronous>, transform_indices = @transform_4, window_bounds = array<i64: 1, 128>}, {transform_indices = @transform_5, window_bounds = array<i64: 128, 128>}]} {
    %c0 = arith.constant 0 : index
    %c0_0 = arith.constant 0 : index
    %0 = vector.load %arg1[%c0, %c0_0] : memref<128x2xi32, #tpu.memory_space<vmem>>, vector<128x2xi32>
    %1 = tpu.iota {dimensions = array<i32: 1>} : vector<128x256xi32>
    %2 = vector.extract_strided_slice %0 {offsets = [0, 0], sizes = [128, 1], strides = [1, 1]} : vector<128x2xi32> to vector<128x1xi32>
    %3 = vector.broadcast %2 : vector<128x1xi32> to vector<128x256xi32>
    %4 = arith.cmpi eq, %1, %3 : vector<128x256xi32>
    %5 = vector.extract_strided_slice %0 {offsets = [0, 1], sizes = [128, 1], strides = [1, 1]} : vector<128x2xi32> to vector<128x1xi32>
    %6 = vector.broadcast %5 : vector<128x1xi32> to vector<128x256xi32>
    %7 = arith.cmpi eq, %1, %6 : vector<128x256xi32>
    %8 = arith.ori %4, %7 : vector<128x256xi1>
    %9 = arith.extui %8 : vector<128x256xi1> to vector<128x256xi32>
    %10 = arith.sitofp %9 : vector<128x256xi32> to vector<128x256xf32>
    %c0_1 = arith.constant 0 : index
    %c0_2 = arith.constant 0 : index
    %11 = vector.load %arg2[%c0_1, %c0_2] : memref<256x128xf32, #tpu.memory_space<vmem>>, vector<256x128xf32>
    %cst = arith.constant dense<0.000000e+00> : vector<128x128xf32>
    %12 = tpu.matmul %10, %11, %cst {dimension_numbers = #tpu.dot_dimension_numbers<[1], [0], [0], [1], [0, 0, 1, 1], [], []>} : vector<128x256xf32>, vector<256x128xf32>, vector<128x128xf32> -> vector<128x128xf32>
    %c0_3 = arith.constant 0 : index
    %c0_4 = arith.constant 0 : index
    %13 = vector.load %arg3[%c0_3, %c0_4] : memref<1x128xf32, #tpu.memory_space<vmem>>, vector<1x128xf32>
    %14 = vector.broadcast %13 : vector<1x128xf32> to vector<128x128xf32>
    %15 = arith.addf %12, %14 : vector<128x128xf32>
    %cst_5 = arith.constant 0.000000e+00 : f32
    %16 = vector.broadcast %cst_5 : f32 to vector<128x128xf32>
    %17 = arith.maximumf %15, %16 : vector<128x128xf32>
    %c0_6 = arith.constant 0 : index
    %c0_7 = arith.constant 0 : index
    %18 = vector.load %arg4[%c0_6, %c0_7] : memref<128x128xf32, #tpu.memory_space<vmem>>, vector<128x128xf32>
    %cst_8 = arith.constant dense<0.000000e+00> : vector<128x128xf32>
    %19 = tpu.matmul %17, %18, %cst_8 {dimension_numbers = #tpu.dot_dimension_numbers<[1], [0], [0], [1], [0, 0, 1, 1], [], []>} : vector<128x128xf32>, vector<128x128xf32>, vector<128x128xf32> -> vector<128x128xf32>
    %c0_9 = arith.constant 0 : index
    %c0_10 = arith.constant 0 : index
    %20 = vector.load %arg5[%c0_9, %c0_10] : memref<1x128xf32, #tpu.memory_space<vmem>>, vector<1x128xf32>
    %21 = vector.broadcast %20 : vector<1x128xf32> to vector<128x128xf32>
    %22 = arith.addf %19, %21 : vector<128x128xf32>
    %cst_11 = arith.constant dense<0xFF800000> : vector<128xf32>
    %23 = vector.multi_reduction <maximumf>, %22, %cst_11 [1] : vector<128x128xf32> to vector<128xf32>
    %24 = vector.shape_cast %23 : vector<128xf32> to vector<128x1xf32>
    %25 = vector.broadcast %24 : vector<128x1xf32> to vector<128x128xf32>
    %26 = arith.subf %22, %25 : vector<128x128xf32>
    %27 = math.exp %26 : vector<128x128xf32>
    %cst_12 = arith.constant dense<0.000000e+00> : vector<128xf32>
    %28 = vector.multi_reduction <add>, %27, %cst_12 [1] : vector<128x128xf32> to vector<128xf32>
    %29 = vector.shape_cast %28 : vector<128xf32> to vector<128x1xf32>
    %30 = math.log %29 : vector<128x1xf32>
    %31 = arith.addf %30, %24 : vector<128x1xf32>
    %32 = vector.broadcast %31 : vector<128x1xf32> to vector<128x128xf32>
    %33 = arith.subf %22, %32 : vector<128x128xf32>
    %c0_13 = arith.constant 0 : index
    %c0_14 = arith.constant 0 : index
    %34 = vector.load %arg6[%c0_13, %c0_14] : memref<128x128xf32, #tpu.memory_space<vmem>>, vector<128x128xf32>
    tpu.vector_store %arg6[%c0_13, %c0_14], %33 {strides = array<i32>} : memref<128x128xf32, #tpu.memory_space<vmem>>, vector<128x128xf32>,
    return
  }
  func.func @transform_0(%arg0: i32) -> (i32, i32) {
    %c0_i32 = arith.constant 0 : i32
    %c0_i32_0 = arith.constant 0 : i32
    return %arg0, %c0_i32 : i32, i32
  }
  func.func @transform_1(%arg0: i32) -> (i32, i32) {
    %c0_i32 = arith.constant 0 : i32
    %c0_i32_0 = arith.constant 0 : i32
    %c0_i32_1 = arith.constant 0 : i32
    return %c0_i32, %c0_i32_0 : i32, i32
  }
  func.func @transform_2(%arg0: i32) -> (i32, i32) {
    %c0_i32 = arith.constant 0 : i32
    %c0_i32_0 = arith.constant 0 : i32
    %c0_i32_1 = arith.constant 0 : i32
    return %c0_i32, %c0_i32_0 : i32, i32
  }
  func.func @transform_3(%arg0: i32) -> (i32, i32) {
    %c0_i32 = arith.constant 0 : i32
    %c0_i32_0 = arith.constant 0 : i32
    %c0_i32_1 = arith.constant 0 : i32
    return %c0_i32, %c0_i32_0 : i32, i32
  }
  func.func @transform_4(%arg0: i32) -> (i32, i32) {
    %c0_i32 = arith.constant 0 : i32
    %c0_i32_0 = arith.constant 0 : i32
    %c0_i32_1 = arith.constant 0 : i32
    return %c0_i32, %c0_i32_0 : i32, i32
  }
  func.func @transform_5(%arg0: i32) -> (i32, i32) {
    %c0_i32 = arith.constant 0 : i32
    %c0_i32_0 = arith.constant 0 : i32
    return %arg0, %c0_i32 : i32, i32
  }
}

</mosaic_0001>

<llo_original>
// kernel: tpu_custom_call.1
$region0: #{tpu_custom_call.1}
  #allocation0 [shape = 'u32[]', space=smem, size = 0x4, offset = 0x4, fixed_abs, tag = 'smem constant byte address 0x4 - core index']
  #allocation1 [shape = 'u32[144,128]{1,0:T(1,128)}', space=vmem, size = 0x12000, scoped, tag = 'internal scratch']
  %s0 = inlined_call_operand.vmem [shape: s32[128,2], index: 0, kind: input, shape index: {}]
  %s1 = inlined_call_operand.hbm [shape: f32[256,128], index: 1, kind: input, shape index: {}]
  %s2 = inlined_call_operand.vmem [shape: f32[1,128], index: 2, kind: input, shape index: {}]
  %s3 = inlined_call_operand.vmem [shape: f32[128,128], index: 3, kind: input, shape index: {}]
  %s4 = inlined_call_operand.vmem [shape: f32[1,128], index: 4, kind: input, shape index: {}]
  %s5 = inlined_call_operand.hbm [shape: f32[128,128], index: 5, kind: output, shape index: {}]
  %s6 = sld [smem:[#allocation0]]
  $region34: #{tpu_custom_call.1} parent=0
    _
  %s8 = ssub.s32 1, %s6
  %s9 = scalar_select 0, %s8, %s6
  $region1: #{tpu_custom_call.1} parent=0
    #allocation2 [shape = 'u8[131072]{0}', space=vmem, size = 0x20000, scoped, tag = 'input window, operand 1, single buffered']
    #allocation3 [shape = 's32[1]{0}', space=sflag, size = 0x4, scoped, tag = 'scoped memory for tpu_custom_call.1']
    #allocation4 [shape = 's32[1]{0}', space=sflag, size = 0x4, scoped, tag = 'scoped memory for tpu_custom_call.1']
    #allocation5 [shape = 'u8[65536]{0}', space=vmem, size = 0x10000, scoped, tag = 'output window, operand 0, single buffered']
    %10 = vsyncpa [#allocation3], 0
    %11 = vsyncpa [#allocation4], 0
    // Predicated region
    $region2: #{tpu_custom_call.1} parent=1 // pred_check
      _
    $region3: #{tpu_custom_call.1} parent=1 // pred_check_branch
      %13 = sbr.rel (0) target = $region5
    $region4: #{tpu_custom_call.1} parent=1 // pred_region
      _
    $region5: #{tpu_custom_call.1} parent=1 // pred_fallthru
      _
    // Predicated region
    $region6: #{tpu_custom_call.1} parent=1 // pred_check
      _
    $region7: #{tpu_custom_call.1} parent=1 // pred_check_branch
      %15 = sbr.rel (0) target = $region9
    $region8: #{tpu_custom_call.1} parent=1 // pred_region
      %s17 = ssub.s32 4096, 4096
      %18 = vsyncadd [#allocation3], %s17
      %s19 = sshll.u32 [#allocation2], 4
      %s20 = int_to_ptr.vmem [resolvable:$true] %s19
      %25 = dma.hbm_to_vmem [thread:$0]  %s1, 4096, %s20, [#allocation3], 128, 128, 8
    $region9: #{tpu_custom_call.1} parent=1 // pred_fallthru
      _
    // Predicated region
    $region10: #{tpu_custom_call.1} parent=1 // pred_check
      _
    $region11: #{tpu_custom_call.1} parent=1 // pred_check_branch
      %27 = sbr.rel (0) target = $region13
    $region12: #{tpu_custom_call.1} parent=1 // pred_region
      _
    $region13: #{tpu_custom_call.1} parent=1 // pred_fallthru
      _
    // Predicated region
    $region14: #{tpu_custom_call.1} parent=1 // pred_check
      _
    $region15: #{tpu_custom_call.1} parent=1 // pred_check_branch
      %29 = sbr.rel (0) target = $region17
    $region16: #{tpu_custom_call.1} parent=1 // pred_region
      _
    $region17: #{tpu_custom_call.1} parent=1 // pred_fallthru
      _
    // Predicated region
    $region18: #{tpu_custom_call.1} parent=1 // pred_check
      _
    $region19: #{tpu_custom_call.1} parent=1 // pred_check_branch
      %31 = sbr.rel (0) target = $region21
    $region20: #{tpu_custom_call.1} parent=1 // pred_region
      _
    $region21: #{tpu_custom_call.1} parent=1 // pred_fallthru
      _
    // Predicated region
    $region22: #{tpu_custom_call.1} parent=1 // pred_check
      _
    $region23: #{tpu_custom_call.1} parent=1 // pred_check_branch
      %33 = sbr.rel (0) target = $region25
    $region24: #{tpu_custom_call.1} parent=1 // pred_region
      %34 = dma.done [#allocation3], 4096
    $region25: #{tpu_custom_call.1} parent=1 // pred_fallthru
      _
    %v35 = vld [vmem:[%s0] sm:$0xff]
    %v36 = vld [vmem:[%s0 + $0x8] sm:$0xff]
    %v37 = vld [vmem:[%s0 + $0x10] sm:$0xff]
    %v38 = vld [vmem:[%s0 + $0x18] sm:$0xff]
    %v39 = vld [vmem:[%s0 + $0x20] sm:$0xff]
    %v40 = vld [vmem:[%s0 + $0x28] sm:$0xff]
    %v41 = vld [vmem:[%s0 + $0x30] sm:$0xff]
    %v42 = vld [vmem:[%s0 + $0x38] sm:$0xff]
    %v43 = vld [vmem:[%s0 + $0x40] sm:$0xff]
    %v44 = vld [vmem:[%s0 + $0x48] sm:$0xff]
    %v45 = vld [vmem:[%s0 + $0x50] sm:$0xff]
    %v46 = vld [vmem:[%s0 + $0x58] sm:$0xff]
    %v47 = vld [vmem:[%s0 + $0x60] sm:$0xff]
    %v48 = vld [vmem:[%s0 + $0x68] sm:$0xff]
    %v49 = vld [vmem:[%s0 + $0x70] sm:$0xff]
    %v50 = vld [vmem:[%s0 + $0x78] sm:$0xff]
    %v51 = vlaneseq
    %v52 = vand.u32 %v51, 127
    %v53 = vadd.s32 %v52, 128
    %54 = vset.pattern.permute.xlu0 0
    %55 = vperm.xlu0 %54, %v35
    %v56 = vpop.permute.xlu0 %55
    %57 = vset.pattern.permute.xlu0 0
    %58 = vperm.xlu0 %57, %v36
    %v59 = vpop.permute.xlu0 %58
    %60 = vset.pattern.permute.xlu0 0
    %61 = vperm.xlu0 %60, %v37
    %v62 = vpop.permute.xlu0 %61
    %63 = vset.pattern.permute.xlu0 0
    %64 = vperm.xlu0 %63, %v38
    %v65 = vpop.permute.xlu0 %64
    %66 = vset.pattern.permute.xlu0 0
    %67 = vperm.xlu0 %66, %v39
    %v68 = vpop.permute.xlu0 %67
    %69 = vset.pattern.permute.xlu0 0
    %70 = vperm.xlu0 %69, %v40
    %v71 = vpop.permute.xlu0 %70
    %72 = vset.pattern.permute.xlu0 0
    %73 = vperm.xlu0 %72, %v41
    %v74 = vpop.permute.xlu0 %73
    %75 = vset.pattern.permute.xlu0 0
    %76 = vperm.xlu0 %75, %v42
    %v77 = vpop.permute.xlu0 %76
    %78 = vset.pattern.permute.xlu0 0
    %79 = vperm.xlu0 %78, %v43
    %v80 = vpop.permute.xlu0 %79
    %81 = vset.pattern.permute.xlu0 0
    %82 = vperm.xlu0 %81, %v44
    %v83 = vpop.permute.xlu0 %82
    %84 = vset.pattern.permute.xlu0 0
    %85 = vperm.xlu0 %84, %v45
    %v86 = vpop.permute.xlu0 %85
    %87 = vset.pattern.permute.xlu0 0
    %88 = vperm.xlu0 %87, %v46
    %v89 = vpop.permute.xlu0 %88
    %90 = vset.pattern.permute.xlu0 0
    %91 = vperm.xlu0 %90, %v47
    %v92 = vpop.permute.xlu0 %91
    %93 = vset.pattern.permute.xlu0 0
    %94 = vperm.xlu0 %93, %v48
    %v95 = vpop.permute.xlu0 %94
    %96 = vset.pattern.permute.xlu0 0
    %97 = vperm.xlu0 %96, %v49
    %v98 = vpop.permute.xlu0 %97
    %99 = vset.pattern.permute.xlu0 0
    %100 = vperm.xlu0 %99, %v50
    %v101 = vpop.permute.xlu0 %100
    %vm102 = vcmp.eq.s32.totalorder %v52, %v56
    %vm103 = vcmp.eq.s32.totalorder %v53, %v56
    %vm104 = vcmp.eq.s32.totalorder %v52, %v59
    %vm105 = vcmp.eq.s32.totalorder %v53, %v59
    %vm106 = vcmp.eq.s32.totalorder %v52, %v62
    %vm107 = vcmp.eq.s32.totalorder %v53, %v62
    %vm108 = vcmp.eq.s32.totalorder %v52, %v65
    %vm109 = vcmp.eq.s32.totalorder %v53, %v65
    %vm110 = vcmp.eq.s32.totalorder %v52, %v68
    %vm111 = vcmp.eq.s32.totalorder %v53, %v68
    %vm112 = vcmp.eq.s32.totalorder %v52, %v71
    %vm113 = vcmp.eq.s32.totalorder %v53, %v71
    %vm114 = vcmp.eq.s32.totalorder %v52, %v74
    %vm115 = vcmp.eq.s32.totalorder %v53, %v74
    %vm116 = vcmp.eq.s32.totalorder %v52, %v77
    %vm117 = vcmp.eq.s32.totalorder %v53, %v77
    %vm118 = vcmp.eq.s32.totalorder %v52, %v80
    %vm119 = vcmp.eq.s32.totalorder %v53, %v80
    %vm120 = vcmp.eq.s32.totalorder %v52, %v83
    %vm121 = vcmp.eq.s32.totalorder %v53, %v83
    %vm122 = vcmp.eq.s32.totalorder %v52, %v86
    %vm123 = vcmp.eq.s32.totalorder %v53, %v86
    %vm124 = vcmp.eq.s32.totalorder %v52, %v89
    %vm125 = vcmp.eq.s32.totalorder %v53, %v89
    %vm126 = vcmp.eq.s32.totalorder %v52, %v92
    %vm127 = vcmp.eq.s32.totalorder %v53, %v92
    %vm128 = vcmp.eq.s32.totalorder %v52, %v95
    %vm129 = vcmp.eq.s32.totalorder %v53, %v95
    %vm130 = vcmp.eq.s32.totalorder %v52, %v98
    %vm131 = vcmp.eq.s32.totalorder %v53, %v98
    %vm132 = vcmp.eq.s32.totalorder %v52, %v101
    %vm133 = vcmp.eq.s32.totalorder %v53, %v101
    %134 = vset.pattern.permute.xlu0 1
    %135 = vperm.xlu0 %134, %v35
    %v136 = vpop.permute.xlu0 %135
    %137 = vset.pattern.permute.xlu0 1
    %138 = vperm.xlu0 %137, %v36
    %v139 = vpop.permute.xlu0 %138
    %140 = vset.pattern.permute.xlu0 1
    %141 = vperm.xlu0 %140, %v37
    %v142 = vpop.permute.xlu0 %141
    %143 = vset.pattern.permute.xlu0 1
    %144 = vperm.xlu0 %143, %v38
    %v145 = vpop.permute.xlu0 %144
    %146 = vset.pattern.permute.xlu0 1
    %147 = vperm.xlu0 %146, %v39
    %v148 = vpop.permute.xlu0 %147
    %149 = vset.pattern.permute.xlu0 1
    %150 = vperm.xlu0 %149, %v40
    %v151 = vpop.permute.xlu0 %150
    %152 = vset.pattern.permute.xlu0 1
    %153 = vperm.xlu0 %152, %v41
    %v154 = vpop.permute.xlu0 %153
    %155 = vset.pattern.permute.xlu0 1
    %156 = vperm.xlu0 %155, %v42
    %v157 = vpop.permute.xlu0 %156
    %158 = vset.pattern.permute.xlu0 1
    %159 = vperm.xlu0 %158, %v43
    %v160 = vpop.permute.xlu0 %159
    %161 = vset.pattern.permute.xlu0 1
    %162 = vperm.xlu0 %161, %v44
    %v163 = vpop.permute.xlu0 %162
    %164 = vset.pattern.permute.xlu0 1
    %165 = vperm.xlu0 %164, %v45
    %v166 = vpop.permute.xlu0 %165
    %167 = vset.pattern.permute.xlu0 1
    %168 = vperm.xlu0 %167, %v46
    %v169 = vpop.permute.xlu0 %168
    %170 = vset.pattern.permute.xlu0 1
    %171 = vperm.xlu0 %170, %v47
    %v172 = vpop.permute.xlu0 %171
    %173 = vset.pattern.permute.xlu0 1
    %174 = vperm.xlu0 %173, %v48
    %v175 = vpop.permute.xlu0 %174
    %176 = vset.pattern.permute.xlu0 1
    %177 = vperm.xlu0 %176, %v49
    %v178 = vpop.permute.xlu0 %177
    %179 = vset.pattern.permute.xlu0 1
    %180 = vperm.xlu0 %179, %v50
    %v181 = vpop.permute.xlu0 %180
    %vm182 = vcmp.eq.s32.totalorder %v52, %v136
    %vm183 = vcmp.eq.s32.totalorder %v53, %v136
    %vm184 = vcmp.eq.s32.totalorder %v52, %v139
    %vm185 = vcmp.eq.s32.totalorder %v53, %v139
    %vm186 = vcmp.eq.s32.totalorder %v52, %v142
    %vm187 = vcmp.eq.s32.totalorder %v53, %v142
    %vm188 = vcmp.eq.s32.totalorder %v52, %v145
    %vm189 = vcmp.eq.s32.totalorder %v53, %v145
    %vm190 = vcmp.eq.s32.totalorder %v52, %v148
    %vm191 = vcmp.eq.s32.totalorder %v53, %v148
    %vm192 = vcmp.eq.s32.totalorder %v52, %v151
    %vm193 = vcmp.eq.s32.totalorder %v53, %v151
    %vm194 = vcmp.eq.s32.totalorder %v52, %v154
    %vm195 = vcmp.eq.s32.totalorder %v53, %v154
    %vm196 = vcmp.eq.s32.totalorder %v52, %v157
    %vm197 = vcmp.eq.s32.totalorder %v53, %v157
    %vm198 = vcmp.eq.s32.totalorder %v52, %v160
    %vm199 = vcmp.eq.s32.totalorder %v53, %v160
    %vm200 = vcmp.eq.s32.totalorder %v52, %v163
    %vm201 = vcmp.eq.s32.totalorder %v53, %v163
    %vm202 = vcmp.eq.s32.totalorder %v52, %v166
    %vm203 = vcmp.eq.s32.totalorder %v53, %v166
    %vm204 = vcmp.eq.s32.totalorder %v52, %v169
    %vm205 = vcmp.eq.s32.totalorder %v53, %v169
    %vm206 = vcmp.eq.s32.totalorder %v52, %v172
    %vm207 = vcmp.eq.s32.totalorder %v53, %v172
    %vm208 = vcmp.eq.s32.totalorder %v52, %v175
    %vm209 = vcmp.eq.s32.totalorder %v53, %v175
    %vm210 = vcmp.eq.s32.totalorder %v52, %v178
    %vm211 = vcmp.eq.s32.totalorder %v53, %v178
    %vm212 = vcmp.eq.s32.totalorder %v52, %v181
    %vm213 = vcmp.eq.s32.totalorder %v53, %v181
    %vm214 = vmor %vm102, %vm182
    %vm215 = vmor %vm103, %vm183
    %vm216 = vmor %vm104, %vm184
    %vm217 = vmor %vm105, %vm185
    %vm218 = vmor %vm106, %vm186
    %vm219 = vmor %vm107, %vm187
    %vm220 = vmor %vm108, %vm188
    %vm221 = vmor %vm109, %vm189
    %vm222 = vmor %vm110, %vm190
    %vm223 = vmor %vm111, %vm191
    %vm224 = vmor %vm112, %vm192
    %vm225 = vmor %vm113, %vm193
    %vm226 = vmor %vm114, %vm194
    %vm227 = vmor %vm115, %vm195
    %vm228 = vmor %vm116, %vm196
    %vm229 = vmor %vm117, %vm197
    %vm230 = vmor %vm118, %vm198
    %vm231 = vmor %vm119, %vm199
    %vm232 = vmor %vm120, %vm200
    %vm233 = vmor %vm121, %vm201
    %vm234 = vmor %vm122, %vm202
    %vm235 = vmor %vm123, %vm203
    %vm236 = vmor %vm124, %vm204
    %vm237 = vmor %vm125, %vm205
    %vm238 = vmor %vm126, %vm206
    %vm239 = vmor %vm127, %vm207
    %vm240 = vmor %vm128, %vm208
    %vm241 = vmor %vm129, %vm209
    %vm242 = vmor %vm130, %vm210
    %vm243 = vmor %vm131, %vm211
    %vm244 = vmor %vm132, %vm212
    %vm245 = vmor %vm133, %vm213
    %v246 = vsel %vm214, 1, 0
    %v247 = vsel %vm215, 1, 0
    %v248 = vsel %vm216, 1, 0
    %v249 = vsel %vm217, 1, 0
    %v250 = vsel %vm218, 1, 0
    %v251 = vsel %vm219, 1, 0
    %v252 = vsel %vm220, 1, 0
    %v253 = vsel %vm221, 1, 0
    %v254 = vsel %vm222, 1, 0
    %v255 = vsel %vm223, 1, 0
    %v256 = vsel %vm224, 1, 0
    %v257 = vsel %vm225, 1, 0
    %v258 = vsel %vm226, 1, 0
    %v259 = vsel %vm227, 1, 0
    %v260 = vsel %vm228, 1, 0
    %v261 = vsel %vm229, 1, 0
    %v262 = vsel %vm230, 1, 0
    %v263 = vsel %vm231, 1, 0
    %v264 = vsel %vm232, 1, 0
    %v265 = vsel %vm233, 1, 0
    %v266 = vsel %vm234, 1, 0
    %v267 = vsel %vm235, 1, 0
    %v268 = vsel %vm236, 1, 0
    %v269 = vsel %vm237, 1, 0
    %v270 = vsel %vm238, 1, 0
    %v271 = vsel %vm239, 1, 0
    %v272 = vsel %vm240, 1, 0
    %v273 = vsel %vm241, 1, 0
    %v274 = vsel %vm242, 1, 0
    %v275 = vsel %vm243, 1, 0
    %v276 = vsel %vm244, 1, 0
    %v277 = vsel %vm245, 1, 0
    %v278 = vcvt.s32.f32 %v246
    %v279 = vcvt.s32.f32 %v247
    %v280 = vcvt.s32.f32 %v248
    %v281 = vcvt.s32.f32 %v249
    %v282 = vcvt.s32.f32 %v250
    %v283 = vcvt.s32.f32 %v251
    %v284 = vcvt.s32.f32 %v252
    %v285 = vcvt.s32.f32 %v253
    %v286 = vcvt.s32.f32 %v254
    %v287 = vcvt.s32.f32 %v255
    %v288 = vcvt.s32.f32 %v256
    %v289 = vcvt.s32.f32 %v257
    %v290 = vcvt.s32.f32 %v258
    %v291 = vcvt.s32.f32 %v259
    %v292 = vcvt.s32.f32 %v260
    %v293 = vcvt.s32.f32 %v261
    %v294 = vcvt.s32.f32 %v262
    %v295 = vcvt.s32.f32 %v263
    %v296 = vcvt.s32.f32 %v264
    %v297 = vcvt.s32.f32 %v265
    %v298 = vcvt.s32.f32 %v266
    %v299 = vcvt.s32.f32 %v267
    %v300 = vcvt.s32.f32 %v268
    %v301 = vcvt.s32.f32 %v269
    %v302 = vcvt.s32.f32 %v270
    %v303 = vcvt.s32.f32 %v271
    %v304 = vcvt.s32.f32 %v272
    %v305 = vcvt.s32.f32 %v273
    %v306 = vcvt.s32.f32 %v274
    %v307 = vcvt.s32.f32 %v275
    %v308 = vcvt.s32.f32 %v276
    %v309 = vcvt.s32.f32 %v277
    %v310 = vld [vmem:[#allocation2] sm:$0xff]
    %v311 = vld [vmem:[#allocation2 + $0x8] sm:$0xff]
    %v312 = vld [vmem:[#allocation2 + $0x10] sm:$0xff]
    %v313 = vld [vmem:[#allocation2 + $0x18] sm:$0xff]
    %v314 = vld [vmem:[#allocation2 + $0x20] sm:$0xff]
    %v315 = vld [vmem:[#allocation2 + $0x28] sm:$0xff]
    %v316 = vld [vmem:[#allocation2 + $0x30] sm:$0xff]
    %v317 = vld [vmem:[#allocation2 + $0x38] sm:$0xff]
    %v318 = vld [vmem:[#allocation2 + $0x40] sm:$0xff]
    %v319 = vld [vmem:[#allocation2 + $0x48] sm:$0xff]
    %v320 = vld [vmem:[#allocation2 + $0x50] sm:$0xff]
    %v321 = vld [vmem:[#allocation2 + $0x58] sm:$0xff]
    %v322 = vld [vmem:[#allocation2 + $0x60] sm:$0xff]
    %v323 = vld [vmem:[#allocation2 + $0x68] sm:$0xff]
    %v324 = vld [vmem:[#allocation2 + $0x70] sm:$0xff]
    %v325 = vld [vmem:[#allocation2 + $0x78] sm:$0xff]
    %v326 = vld [vmem:[#allocation2 + $0x80] sm:$0xff]
    %v327 = vld [vmem:[#allocation2 + $0x88] sm:$0xff]
    %v328 = vld [vmem:[#allocation2 + $0x90] sm:$0xff]
    %v329 = vld [vmem:[#allocation2 + $0x98] sm:$0xff]
    %v330 = vld [vmem:[#allocation2 + $0xa0] sm:$0xff]
    %v331 = vld [vmem:[#allocation2 + $0xa8] sm:$0xff]
    %v332 = vld [vmem:[#allocation2 + $0xb0] sm:$0xff]
    %v333 = vld [vmem:[#allocation2 + $0xb8] sm:$0xff]
    %v334 = vld [vmem:[#allocation2 + $0xc0] sm:$0xff]
    %v335 = vld [vmem:[#allocation2 + $0xc8] sm:$0xff]
    %v336 = vld [vmem:[#allocation2 + $0xd0] sm:$0xff]
    %v337 = vld [vmem:[#allocation2 + $0xd8] sm:$0xff]
    %v338 = vld [vmem:[#allocation2 + $0xe0] sm:$0xff]
    %v339 = vld [vmem:[#allocation2 + $0xe8] sm:$0xff]
    %v340 = vld [vmem:[#allocation2 + $0xf0] sm:$0xff]
    %v341 = vld [vmem:[#allocation2 + $0xf8] sm:$0xff]
    %v342 = vld [vmem:[%s2] sm:$0x1]
    %v344 = vlaneseq
    %v345 = vshrl.u32 %v344, 7
    %v346 = vsub.s32 0, %v345
    %v347 = vrot.slane %v342, %v346
    %349 = vmatprep.subr.mxu0 0.0
    %350 = vmatpush1.msra.mxu0 %v310
    %351 = vmatprep.subr.mxu0 0.0
    %352 = vmatpush1.msra.mxu0 %v311
    %353 = vmatprep.subr.mxu0 0.0
    %354 = vmatpush1.msra.mxu0 %v312
    %355 = vmatprep.subr.mxu0 0.0
    %356 = vmatpush1.msra.mxu0 %v313
    %357 = vmatprep.subr.mxu0 0.0
    %358 = vmatpush1.msra.mxu0 %v314
    %359 = vmatprep.subr.mxu0 0.0
    %360 = vmatpush1.msra.mxu0 %v315
    %361 = vmatprep.subr.mxu0 0.0
    %362 = vmatpush1.msra.mxu0 %v316
    %363 = vmatprep.subr.mxu0 0.0
    %364 = vmatpush1.msra.mxu0 %v317
    %365 = vmatprep.subr.mxu0 0.0
    %366 = vmatpush1.msra.mxu0 %v318
    %367 = vmatprep.subr.mxu0 0.0
    %368 = vmatpush1.msra.mxu0 %v319
    %369 = vmatprep.subr.mxu0 0.0
    %370 = vmatpush1.msra.mxu0 %v320
    %371 = vmatprep.subr.mxu0 0.0
    %372 = vmatpush1.msra.mxu0 %v321
    %373 = vmatprep.subr.mxu0 0.0
    %374 = vmatpush1.msra.mxu0 %v322
    %375 = vmatprep.subr.mxu0 0.0
    %376 = vmatpush1.msra.mxu0 %v323
    %377 = vmatprep.subr.mxu0 0.0
    %378 = vmatpush1.msra.mxu0 %v324
    %379 = vmatprep.subr.mxu0 0.0
    %380 = vmatpush1.msra.mxu0 %v325
    %381 = vmatprep.subr.mxu0 0.0
    %382 = vmatpush1.msra.mxu0 %v326
    %383 = vmatprep.subr.mxu0 0.0
    %384 = vmatpush1.msra.mxu0 %v327
    %385 = vmatprep.subr.mxu0 0.0
    %386 = vmatpush1.msra.mxu0 %v328
    %387 = vmatprep.subr.mxu0 0.0
    %388 = vmatpush1.msra.mxu0 %v329
    %389 = vmatprep.subr.mxu0 0.0
    %390 = vmatpush1.msra.mxu0 %v330
    %391 = vmatprep.subr.mxu0 0.0
    %392 = vmatpush1.msra.mxu0 %v331
    %393 = vmatprep.subr.mxu0 0.0
    %394 = vmatpush1.msra.mxu0 %v332
    %395 = vmatprep.subr.mxu0 0.0
    %396 = vmatpush1.msra.mxu0 %v333
    %397 = vmatprep.subr.mxu0 0.0
    %398 = vmatpush1.msra.mxu0 %v334
    %399 = vmatprep.subr.mxu0 0.0
    %400 = vmatpush1.msra.mxu0 %v335
    %401 = vmatprep.subr.mxu0 0.0
    %402 = vmatpush1.msra.mxu0 %v336
    %403 = vmatprep.subr.mxu0 0.0
    %404 = vmatpush1.msra.mxu0 %v337
    %405 = vmatprep.subr.mxu0 0.0
    %406 = vmatpush1.msra.mxu0 %v338
    %407 = vmatprep.subr.mxu0 0.0
    %408 = vmatpush1.msra.mxu0 %v339
    %409 = vmatprep.subr.mxu0 0.0
    %410 = vmatpush1.msra.mxu0 %v340
    %411 = vmatprep.subr.mxu0 0.0
    %412 = vmatpush1.msra.mxu0 %v341
    %413 = vmatprep.mubr.f32.mxu0 %v279
    %414 = vmatmul.mubr.f32.gmra.mrb[0].mxu0 %v278
    %v415 = vpop.f32.mrb[0].mxu0
    %v416 = vadd.f32 %v347, %v415
    %v417 = vpop.f32.mrb[0].mxu0
    %418 = vmatprep.mubr.f32.mxu0 %v281
    %419 = vmatmul.mubr.f32.gmra.mrb[0].mxu0 %v280
    %v420 = vpop.f32.mrb[0].mxu0
    %v421 = vadd.f32 %v347, %v420
    %v422 = vpop.f32.mrb[0].mxu0
    %423 = vmatprep.mubr.f32.mxu0 %v283
    %424 = vmatmul.mubr.f32.gmra.mrb[0].mxu0 %v282
    %v425 = vpop.f32.mrb[0].mxu0
    %v426 = vadd.f32 %v347, %v425
    %v427 = vpop.f32.mrb[0].mxu0
    %428 = vmatprep.mubr.f32.mxu0 %v285
    %429 = vmatmul.mubr.f32.gmra.mrb[0].mxu0 %v284
    %v430 = vpop.f32.mrb[0].mxu0
    %v431 = vadd.f32 %v347, %v430
    %v432 = vpop.f32.mrb[0].mxu0
    %433 = vmatprep.mubr.f32.mxu0 %v287
    %434 = vmatmul.mubr.f32.gmra.mrb[0].mxu0 %v286
    %v435 = vpop.f32.mrb[0].mxu0
    %v436 = vadd.f32 %v347, %v435
    %v437 = vpop.f32.mrb[0].mxu0
    %438 = vmatprep.mubr.f32.mxu0 %v289
    %439 = vmatmul.mubr.f32.gmra.mrb[0].mxu0 %v288
    %v440 = vpop.f32.mrb[0].mxu0
    %v441 = vadd.f32 %v347, %v440
    %v442 = vpop.f32.mrb[0].mxu0
    %443 = vmatprep.mubr.f32.mxu0 %v291
    %444 = vmatmul.mubr.f32.gmra.mrb[0].mxu0 %v290
    %v445 = vpop.f32.mrb[0].mxu0
    %v446 = vadd.f32 %v347, %v445
    %v447 = vpop.f32.mrb[0].mxu0
    %448 = vmatprep.mubr.f32.mxu0 %v293
    %449 = vmatmul.mubr.f32.gmra.mrb[0].mxu0 %v292
    %v450 = vpop.f32.mrb[0].mxu0
    %v451 = vadd.f32 %v347, %v450
    %v452 = vpop.f32.mrb[0].mxu0
    %453 = vmatprep.mubr.f32.mxu0 %v295
    %454 = vmatmul.mubr.f32.gmra.mrb[0].mxu0 %v294
    %v455 = vpop.f32.mrb[0].mxu0
    %v456 = vadd.f32 %v347, %v455
    %v457 = vpop.f32.mrb[0].mxu0
    %458 = vmatprep.mubr.f32.mxu0 %v297
    %459 = vmatmul.mubr.f32.gmra.mrb[0].mxu0 %v296
    %v460 = vpop.f32.mrb[0].mxu0
    %v461 = vadd.f32 %v347, %v460
    %v462 = vpop.f32.mrb[0].mxu0
    %463 = vmatprep.mubr.f32.mxu0 %v299
    %464 = vmatmul.mubr.f32.gmra.mrb[0].mxu0 %v298
    %v465 = vpop.f32.mrb[0].mxu0
    %v466 = vadd.f32 %v347, %v465
    %v467 = vpop.f32.mrb[0].mxu0
    %468 = vmatprep.mubr.f32.mxu0 %v301
    %469 = vmatmul.mubr.f32.gmra.mrb[0].mxu0 %v300
    %v470 = vpop.f32.mrb[0].mxu0
    %v471 = vadd.f32 %v347, %v470
    %v472 = vpop.f32.mrb[0].mxu0
    %473 = vmatprep.mubr.f32.mxu0 %v303
    %474 = vmatmul.mubr.f32.gmra.mrb[0].mxu0 %v302
    %v475 = vpop.f32.mrb[0].mxu0
    %v476 = vadd.f32 %v347, %v475
    %v477 = vpop.f32.mrb[0].mxu0
    %478 = vmatprep.mubr.f32.mxu0 %v305
    %479 = vmatmul.mubr.f32.gmra.mrb[0].mxu0 %v304
    %v480 = vpop.f32.mrb[0].mxu0
    %v481 = vadd.f32 %v347, %v480
    %v482 = vpop.f32.mrb[0].mxu0
    %483 = vmatprep.mubr.f32.mxu0 %v307
    %484 = vmatmul.mubr.f32.gmra.mrb[0].mxu0 %v306
    %v485 = vpop.f32.mrb[0].mxu0
    %v486 = vadd.f32 %v347, %v485
    %v487 = vpop.f32.mrb[0].mxu0
    %488 = vmatprep.mubr.f32.mxu0 %v309
    %489 = vmatmul.mubr.f32.gmra.mrb[0].mxu0 %v308
    %v490 = vpop.f32.mrb[0].mxu0
    %v491 = vadd.f32 %v347, %v490
    %v492 = vpop.f32.mrb[0].mxu0
    %493 = vdwg.mxu0
    %v494 = vmax.f32 %v416, 0.0
    %v495 = vmax.f32 %v421, 0.0
    %v496 = vmax.f32 %v426, 0.0
    %v497 = vmax.f32 %v431, 0.0
    %v498 = vmax.f32 %v436, 0.0
    %v499 = vmax.f32 %v441, 0.0
    %v500 = vmax.f32 %v446, 0.0
    %v501 = vmax.f32 %v451, 0.0
    %v502 = vmax.f32 %v456, 0.0
    %v503 = vmax.f32 %v461, 0.0
    %v504 = vmax.f32 %v466, 0.0
    %v505 = vmax.f32 %v471, 0.0
    %v506 = vmax.f32 %v476, 0.0
    %v507 = vmax.f32 %v481, 0.0
    %v508 = vmax.f32 %v486, 0.0
    %v509 = vmax.f32 %v491, 0.0
    %v510 = vld [vmem:[%s3] sm:$0xff]
    %v511 = vld [vmem:[%s3 + $0x8] sm:$0xff]
    %v512 = vld [vmem:[%s3 + $0x10] sm:$0xff]
    %v513 = vld [vmem:[%s3 + $0x18] sm:$0xff]
    %v514 = vld [vmem:[%s3 + $0x20] sm:$0xff]
    %v515 = vld [vmem:[%s3 + $0x28] sm:$0xff]
    %v516 = vld [vmem:[%s3 + $0x30] sm:$0xff]
    %v517 = vld [vmem:[%s3 + $0x38] sm:$0xff]
    %v518 = vld [vmem:[%s3 + $0x40] sm:$0xff]
    %v519 = vld [vmem:[%s3 + $0x48] sm:$0xff]
    %v520 = vld [vmem:[%s3 + $0x50] sm:$0xff]
    %v521 = vld [vmem:[%s3 + $0x58] sm:$0xff]
    %v522 = vld [vmem:[%s3 + $0x60] sm:$0xff]
    %v523 = vld [vmem:[%s3 + $0x68] sm:$0xff]
    %v524 = vld [vmem:[%s3 + $0x70] sm:$0xff]
    %v525 = vld [vmem:[%s3 + $0x78] sm:$0xff]
    %v526 = vld [vmem:[%s4] sm:$0x1]
    %v528 = vlaneseq
    %v529 = vshrl.u32 %v528, 7
    %v530 = vsub.s32 0, %v529
    %v531 = vrot.slane %v526, %v530
    %533 = vmatprep.subr.mxu0 0.0
    %534 = vmatpush1.msra.mxu0 %v510
    %535 = vmatprep.subr.mxu0 0.0
    %536 = vmatpush1.msra.mxu0 %v511
    %537 = vmatprep.subr.mxu0 0.0
    %538 = vmatpush1.msra.mxu0 %v512
    %539 = vmatprep.subr.mxu0 0.0
    %540 = vmatpush1.msra.mxu0 %v513
    %541 = vmatprep.subr.mxu0 0.0
    %542 = vmatpush1.msra.mxu0 %v514
    %543 = vmatprep.subr.mxu0 0.0
    %544 = vmatpush1.msra.mxu0 %v515
    %545 = vmatprep.subr.mxu0 0.0
    %546 = vmatpush1.msra.mxu0 %v516
    %547 = vmatprep.subr.mxu0 0.0
    %548 = vmatpush1.msra.mxu0 %v517
    %549 = vmatprep.subr.mxu0 0.0
    %550 = vmatpush1.msra.mxu0 %v518
    %551 = vmatprep.subr.mxu0 0.0
    %552 = vmatpush1.msra.mxu0 %v519
    %553 = vmatprep.subr.mxu0 0.0
    %554 = vmatpush1.msra.mxu0 %v520
    %555 = vmatprep.subr.mxu0 0.0
    %556 = vmatpush1.msra.mxu0 %v521
    %557 = vmatprep.subr.mxu0 0.0
    %558 = vmatpush1.msra.mxu0 %v522
    %559 = vmatprep.subr.mxu0 0.0
    %560 = vmatpush1.msra.mxu0 %v523
    %561 = vmatprep.subr.mxu0 0.0
    %562 = vmatpush1.msra.mxu0 %v524
    %563 = vmatprep.subr.mxu0 0.0
    %564 = vmatpush1.msra.mxu0 %v525
    %565 = vmatprep.subr.mxu0 0.0
    %566 = vmatpush1.msra.mxu0 0.0
    %567 = vmatprep.subr.mxu0 0.0
    %568 = vmatpush1.msra.mxu0 0.0
    %569 = vmatprep.subr.mxu0 0.0
    %570 = vmatpush1.msra.mxu0 0.0
    %571 = vmatprep.subr.mxu0 0.0
    %572 = vmatpush1.msra.mxu0 0.0
    %573 = vmatprep.subr.mxu0 0.0
    %574 = vmatpush1.msra.mxu0 0.0
    %575 = vmatprep.subr.mxu0 0.0
    %576 = vmatpush1.msra.mxu0 0.0
    %577 = vmatprep.subr.mxu0 0.0
    %578 = vmatpush1.msra.mxu0 0.0
    %579 = vmatprep.subr.mxu0 0.0
    %580 = vmatpush1.msra.mxu0 0.0
    %581 = vmatprep.subr.mxu0 0.0
    %582 = vmatpush1.msra.mxu0 0.0
    %583 = vmatprep.subr.mxu0 0.0
    %584 = vmatpush1.msra.mxu0 0.0
    %585 = vmatprep.subr.mxu0 0.0
    %586 = vmatpush1.msra.mxu0 0.0
    %587 = vmatprep.subr.mxu0 0.0
    %588 = vmatpush1.msra.mxu0 0.0
    %589 = vmatprep.subr.mxu0 0.0
    %590 = vmatpush1.msra.mxu0 0.0
    %591 = vmatprep.subr.mxu0 0.0
    %592 = vmatpush1.msra.mxu0 0.0
    %593 = vmatprep.subr.mxu0 0.0
    %594 = vmatpush1.msra.mxu0 0.0
    %595 = vmatprep.subr.mxu0 0.0
    %596 = vmatpush1.msra.mxu0 0.0
    %597 = vmatprep.mubr.f32.mxu0 0.0
    %598 = vmatmul.mubr.f32.gmra.mrb[0].mxu0 %v494
    %v599 = vpop.f32.mrb[0].mxu0
    %v600 = vadd.f32 %v531, %v599
    %v601 = vpop.f32.mrb[0].mxu0
    %602 = vmatprep.mubr.f32.mxu0 0.0
    %603 = vmatmul.mubr.f32.gmra.mrb[0].mxu0 %v495
    %v604 = vpop.f32.mrb[0].mxu0
    %v605 = vadd.f32 %v531, %v604
    %v606 = vpop.f32.mrb[0].mxu0
    %607 = vmatprep.mubr.f32.mxu0 0.0
    %608 = vmatmul.mubr.f32.gmra.mrb[0].mxu0 %v496
    %v609 = vpop.f32.mrb[0].mxu0
    %v610 = vadd.f32 %v531, %v609
    %v611 = vpop.f32.mrb[0].mxu0
    %612 = vmatprep.mubr.f32.mxu0 0.0
    %613 = vmatmul.mubr.f32.gmra.mrb[0].mxu0 %v497
    %v614 = vpop.f32.mrb[0].mxu0
    %v615 = vadd.f32 %v531, %v614
    %v616 = vpop.f32.mrb[0].mxu0
    %617 = vmatprep.mubr.f32.mxu0 0.0
    %618 = vmatmul.mubr.f32.gmra.mrb[0].mxu0 %v498
    %v619 = vpop.f32.mrb[0].mxu0
    %v620 = vadd.f32 %v531, %v619
    %v621 = vpop.f32.mrb[0].mxu0
    %622 = vmatprep.mubr.f32.mxu0 0.0
    %623 = vmatmul.mubr.f32.gmra.mrb[0].mxu0 %v499
    %v624 = vpop.f32.mrb[0].mxu0
    %v625 = vadd.f32 %v531, %v624
    %v626 = vpop.f32.mrb[0].mxu0
    %627 = vmatprep.mubr.f32.mxu0 0.0
    %628 = vmatmul.mubr.f32.gmra.mrb[0].mxu0 %v500
    %v629 = vpop.f32.mrb[0].mxu0
    %v630 = vadd.f32 %v531, %v629
    %v631 = vpop.f32.mrb[0].mxu0
    %632 = vmatprep.mubr.f32.mxu0 0.0
    %633 = vmatmul.mubr.f32.gmra.mrb[0].mxu0 %v501
    %v634 = vpop.f32.mrb[0].mxu0
    %v635 = vadd.f32 %v531, %v634
    %v636 = vpop.f32.mrb[0].mxu0
    %637 = vmatprep.mubr.f32.mxu0 0.0
    %638 = vmatmul.mubr.f32.gmra.mrb[0].mxu0 %v502
    %v639 = vpop.f32.mrb[0].mxu0
    %v640 = vadd.f32 %v531, %v639
    %v641 = vpop.f32.mrb[0].mxu0
    %642 = vmatprep.mubr.f32.mxu0 0.0
    %643 = vmatmul.mubr.f32.gmra.mrb[0].mxu0 %v503
    %v644 = vpop.f32.mrb[0].mxu0
    %v645 = vadd.f32 %v531, %v644
    %v646 = vpop.f32.mrb[0].mxu0
    %647 = vmatprep.mubr.f32.mxu0 0.0
    %648 = vmatmul.mubr.f32.gmra.mrb[0].mxu0 %v504
    %v649 = vpop.f32.mrb[0].mxu0
    %v650 = vadd.f32 %v531, %v649
    %v651 = vpop.f32.mrb[0].mxu0
    %652 = vmatprep.mubr.f32.mxu0 0.0
    %653 = vmatmul.mubr.f32.gmra.mrb[0].mxu0 %v505
    %v654 = vpop.f32.mrb[0].mxu0
    %v655 = vadd.f32 %v531, %v654
    %v656 = vpop.f32.mrb[0].mxu0
    %657 = vmatprep.mubr.f32.mxu0 0.0
    %658 = vmatmul.mubr.f32.gmra.mrb[0].mxu0 %v506
    %v659 = vpop.f32.mrb[0].mxu0
    %v660 = vadd.f32 %v531, %v659
    %v661 = vpop.f32.mrb[0].mxu0
    %662 = vmatprep.mubr.f32.mxu0 0.0
    %663 = vmatmul.mubr.f32.gmra.mrb[0].mxu0 %v507
    %v664 = vpop.f32.mrb[0].mxu0
    %v665 = vadd.f32 %v531, %v664
    %v666 = vpop.f32.mrb[0].mxu0
    %667 = vmatprep.mubr.f32.mxu0 0.0
    %668 = vmatmul.mubr.f32.gmra.mrb[0].mxu0 %v508
    %v669 = vpop.f32.mrb[0].mxu0
    %v670 = vadd.f32 %v531, %v669
    %v671 = vpop.f32.mrb[0].mxu0
    %672 = vmatprep.mubr.f32.mxu0 0.0
    %673 = vmatmul.mubr.f32.gmra.mrb[0].mxu0 %v509
    %v674 = vpop.f32.mrb[0].mxu0
    %v675 = vadd.f32 %v531, %v674
    %v676 = vpop.f32.mrb[0].mxu0
    %677 = vdwg.mxu0
    %678 = vmax.xlane.f32.xlu0 %v600
    %v679 = vpop.xlane.xlu0 %678
    %680 = vmax.xlane.f32.xlu0 %v605
    %v681 = vpop.xlane.xlu0 %680
    %682 = vmax.xlane.f32.xlu0 %v610
    %v683 = vpop.xlane.xlu0 %682
    %684 = vmax.xlane.f32.xlu0 %v615
    %v685 = vpop.xlane.xlu0 %684
    %686 = vmax.xlane.f32.xlu0 %v620
    %v687 = vpop.xlane.xlu0 %686
    %688 = vmax.xlane.f32.xlu0 %v625
    %v689 = vpop.xlane.xlu0 %688
    %690 = vmax.xlane.f32.xlu0 %v630
    %v691 = vpop.xlane.xlu0 %690
    %692 = vmax.xlane.f32.xlu0 %v635
    %v693 = vpop.xlane.xlu0 %692
    %694 = vmax.xlane.f32.xlu0 %v640
    %v695 = vpop.xlane.xlu0 %694
    %696 = vmax.xlane.f32.xlu0 %v645
    %v697 = vpop.xlane.xlu0 %696
    %698 = vmax.xlane.f32.xlu0 %v650
    %v699 = vpop.xlane.xlu0 %698
    %700 = vmax.xlane.f32.xlu0 %v655
    %v701 = vpop.xlane.xlu0 %700
    %702 = vmax.xlane.f32.xlu0 %v660
    %v703 = vpop.xlane.xlu0 %702
    %704 = vmax.xlane.f32.xlu0 %v665
    %v705 = vpop.xlane.xlu0 %704
    %706 = vmax.xlane.f32.xlu0 %v670
    %v707 = vpop.xlane.xlu0 %706
    %708 = vmax.xlane.f32.xlu0 %v675
    %v709 = vpop.xlane.xlu0 %708
    %v710 = vsub.f32 %v600, %v679
    %v711 = vsub.f32 %v605, %v681
    %v712 = vsub.f32 %v610, %v683
    %v713 = vsub.f32 %v615, %v685
    %v714 = vsub.f32 %v620, %v687
    %v715 = vsub.f32 %v625, %v689
    %v716 = vsub.f32 %v630, %v691
    %v717 = vsub.f32 %v635, %v693
    %v718 = vsub.f32 %v640, %v695
    %v719 = vsub.f32 %v645, %v697
    %v720 = vsub.f32 %v650, %v699
    %v721 = vsub.f32 %v655, %v701
    %v722 = vsub.f32 %v660, %v703
    %v723 = vsub.f32 %v665, %v705
    %v724 = vsub.f32 %v670, %v707
    %v725 = vsub.f32 %v675, %v709
    %v726 = vmul.f32 %v710, 1.442695
    %v727 = vpow.pop %v726
    %v728 = vmul.f32 %v711, 1.442695
    %v729 = vpow.pop %v728
    %v730 = vmul.f32 %v712, 1.442695
    %v731 = vpow.pop %v730
    %v732 = vmul.f32 %v713, 1.442695
    %v733 = vpow.pop %v732
    %v734 = vmul.f32 %v714, 1.442695
    %v735 = vpow.pop %v734
    %v736 = vmul.f32 %v715, 1.442695
    %v737 = vpow.pop %v736
    %v738 = vmul.f32 %v716, 1.442695
    %v739 = vpow.pop %v738
    %v740 = vmul.f32 %v717, 1.442695
    %v741 = vpow.pop %v740
    %v742 = vmul.f32 %v718, 1.442695
    %v743 = vpow.pop %v742
    %v744 = vmul.f32 %v719, 1.442695
    %v745 = vpow.pop %v744
    %v746 = vmul.f32 %v720, 1.442695
    %v747 = vpow.pop %v746
    %v748 = vmul.f32 %v721, 1.442695
    %v749 = vpow.pop %v748
    %v750 = vmul.f32 %v722, 1.442695
    %v751 = vpow.pop %v750
    %v752 = vmul.f32 %v723, 1.442695
    %v753 = vpow.pop %v752
    %v754 = vmul.f32 %v724, 1.442695
    %v755 = vpow.pop %v754
    %v756 = vmul.f32 %v725, 1.442695
    %v757 = vpow.pop %v756
    %758 = vadd.xlane.f32.xlu0 %v727
    %v759 = vpop.xlane.xlu0 %758
    %760 = vadd.xlane.f32.xlu0 %v729
    %v761 = vpop.xlane.xlu0 %760
    %762 = vadd.xlane.f32.xlu0 %v731
    %v763 = vpop.xlane.xlu0 %762
    %764 = vadd.xlane.f32.xlu0 %v733
    %v765 = vpop.xlane.xlu0 %764
    %766 = vadd.xlane.f32.xlu0 %v735
    %v767 = vpop.xlane.xlu0 %766
    %768 = vadd.xlane.f32.xlu0 %v737
    %v769 = vpop.xlane.xlu0 %768
    %770 = vadd.xlane.f32.xlu0 %v739
    %v771 = vpop.xlane.xlu0 %770
    %772 = vadd.xlane.f32.xlu0 %v741
    %v773 = vpop.xlane.xlu0 %772
    %774 = vadd.xlane.f32.xlu0 %v743
    %v775 = vpop.xlane.xlu0 %774
    %776 = vadd.xlane.f32.xlu0 %v745
    %v777 = vpop.xlane.xlu0 %776
    %778 = vadd.xlane.f32.xlu0 %v747
    %v779 = vpop.xlane.xlu0 %778
    %780 = vadd.xlane.f32.xlu0 %v749
    %v781 = vpop.xlane.xlu0 %780
    %782 = vadd.xlane.f32.xlu0 %v751
    %v783 = vpop.xlane.xlu0 %782
    %784 = vadd.xlane.f32.xlu0 %v753
    %v785 = vpop.xlane.xlu0 %784
    %786 = vadd.xlane.f32.xlu0 %v755
    %v787 = vpop.xlane.xlu0 %786
    %788 = vadd.xlane.f32.xlu0 %v757
    %v789 = vpop.xlane.xlu0 %788
    %v790 = vlog2.pop %v759
    %v791 = vmul.f32 %v790, 0.6931472
    %v792 = vlog2.pop %v761
    %v793 = vmul.f32 %v792, 0.6931472
    %v794 = vlog2.pop %v763
    %v795 = vmul.f32 %v794, 0.6931472
    %v796 = vlog2.pop %v765
    %v797 = vmul.f32 %v796, 0.6931472
    %v798 = vlog2.pop %v767
    %v799 = vmul.f32 %v798, 0.6931472
    %v800 = vlog2.pop %v769
    %v801 = vmul.f32 %v800, 0.6931472
    %v802 = vlog2.pop %v771
    %v803 = vmul.f32 %v802, 0.6931472
    %v804 = vlog2.pop %v773
    %v805 = vmul.f32 %v804, 0.6931472
    %v806 = vlog2.pop %v775
    %v807 = vmul.f32 %v806, 0.6931472
    %v808 = vlog2.pop %v777
    %v809 = vmul.f32 %v808, 0.6931472
    %v810 = vlog2.pop %v779
    %v811 = vmul.f32 %v810, 0.6931472
    %v812 = vlog2.pop %v781
    %v813 = vmul.f32 %v812, 0.6931472
    %v814 = vlog2.pop %v783
    %v815 = vmul.f32 %v814, 0.6931472
    %v816 = vlog2.pop %v785
    %v817 = vmul.f32 %v816, 0.6931472
    %v818 = vlog2.pop %v787
    %v819 = vmul.f32 %v818, 0.6931472
    %v820 = vlog2.pop %v789
    %v821 = vmul.f32 %v820, 0.6931472
    %v822 = vadd.f32 %v791, %v679
    %v823 = vadd.f32 %v793, %v681
    %v824 = vadd.f32 %v795, %v683
    %v825 = vadd.f32 %v797, %v685
    %v826 = vadd.f32 %v799, %v687
    %v827 = vadd.f32 %v801, %v689
    %v828 = vadd.f32 %v803, %v691
    %v829 = vadd.f32 %v805, %v693
    %v830 = vadd.f32 %v807, %v695
    %v831 = vadd.f32 %v809, %v697
    %v832 = vadd.f32 %v811, %v699
    %v833 = vadd.f32 %v813, %v701
    %v834 = vadd.f32 %v815, %v703
    %v835 = vadd.f32 %v817, %v705
    %v836 = vadd.f32 %v819, %v707
    %v837 = vadd.f32 %v821, %v709
    %v838 = vsub.f32 %v600, %v822
    %v839 = vsub.f32 %v605, %v823
    %v840 = vsub.f32 %v610, %v824
    %v841 = vsub.f32 %v615, %v825
    %v842 = vsub.f32 %v620, %v826
    %v843 = vsub.f32 %v625, %v827
    %v844 = vsub.f32 %v630, %v828
    %v845 = vsub.f32 %v635, %v829
    %v846 = vsub.f32 %v640, %v830
    %v847 = vsub.f32 %v645, %v831
    %v848 = vsub.f32 %v650, %v832
    %v849 = vsub.f32 %v655, %v833
    %v850 = vsub.f32 %v660, %v834
    %v851 = vsub.f32 %v665, %v835
    %v852 = vsub.f32 %v670, %v836
    %v853 = vsub.f32 %v675, %v837
    %854 = vst [vmem:[#allocation5] sm:$0xff] %v838
    %855 = vst [vmem:[#allocation5 + $0x8] sm:$0xff] %v839
    %856 = vst [vmem:[#allocation5 + $0x10] sm:$0xff] %v840
    %857 = vst [vmem:[#allocation5 + $0x18] sm:$0xff] %v841
    %858 = vst [vmem:[#allocation5 + $0x20] sm:$0xff] %v842
    %859 = vst [vmem:[#allocation5 + $0x28] sm:$0xff] %v843
    %860 = vst [vmem:[#allocation5 + $0x30] sm:$0xff] %v844
    %861 = vst [vmem:[#allocation5 + $0x38] sm:$0xff] %v845
    %862 = vst [vmem:[#allocation5 + $0x40] sm:$0xff] %v846
    %863 = vst [vmem:[#allocation5 + $0x48] sm:$0xff] %v847
    %864 = vst [vmem:[#allocation5 + $0x50] sm:$0xff] %v848
    %865 = vst [vmem:[#allocation5 + $0x58] sm:$0xff] %v849
    %866 = vst [vmem:[#allocation5 + $0x60] sm:$0xff] %v850
    %867 = vst [vmem:[#allocation5 + $0x68] sm:$0xff] %v851
    %868 = vst [vmem:[#allocation5 + $0x70] sm:$0xff] %v852
    %869 = vst [vmem:[#allocation5 + $0x78] sm:$0xff] %v853
    // Predicated region
    $region26: #{tpu_custom_call.1} parent=1 // pred_check
      _
    $region27: #{tpu_custom_call.1} parent=1 // pred_check_branch
      %871 = sbr.rel (0) target = $region29
    $region28: #{tpu_custom_call.1} parent=1 // pred_region
      %s873 = ssub.s32 2048, 2048
      %874 = vsyncadd [#allocation4], %s873
      %s875 = sshll.u32 [#allocation5], 4
      %s876 = int_to_ptr.vmem [resolvable:$true] %s875
      %881 = dma.vmem_to_hbm [thread:$0]  %s876, 2048, %s5, [#allocation4], 128, 128, 8
    $region29: #{tpu_custom_call.1} parent=1 // pred_fallthru
      _
    // Predicated region
    $region30: #{tpu_custom_call.1} parent=1 // pred_check
      _
    $region31: #{tpu_custom_call.1} parent=1 // pred_check_branch
      %883 = sbr.rel (0) target = $region33
    $region32: #{tpu_custom_call.1} parent=1 // pred_region
      %884 = dma.done [#allocation4], 2048
    $region33: #{tpu_custom_call.1} parent=1 // pred_fallthru
      _
    %885 = vsyncpa [#allocation3], 1
    %886 = vsyncpa [#allocation4], 1

</llo_original>
